<compile_context>
chip_gen: v6e
topology: v6e:2x2x1
jax: 0.10.0
libtpu: 0.0.40
codegen_flags: <defaults>
</compile_context>

<pallas_src>
import jax
import jax.numpy as jnp
from jax.experimental import pallas as pl
from jax.experimental.pallas import tpu as pltpu

LANE = 128          # vreg lane width; all hidden dims are padded to this
F_IN = 4            # input feature dim
HID1 = 64           # conv1 output dim (real columns inside the 128-lane pad)
HID2 = 32           # conv2 output dim (real columns inside the 128-lane pad)


# ----------------------------- Pallas kernel ---------------------------------
def gcn_kernel(a_ref, x_ref, w1_ref, b1_ref, w2_ref, b2_ref,
               fcw_ref, fcb_ref, out_ref):
    n = a_ref.shape[0]                      # static
    inv_n = 1.0 / float(n)

    a = a_ref[...]                          # [N, N]  bf16 normalized adjacency
    x = x_ref[...]                          # [N, 4]  f32 node features

    # ---- GCNConv(4 -> 64, padded to 128): A_hat @ (X @ W1) + b1, ReLU ----
    xw = jnp.dot(x, w1_ref[...], preferred_element_type=jnp.float32)          # [N, 128]
    h = jnp.dot(a, xw.astype(jnp.bfloat16),
                preferred_element_type=jnp.float32) + b1_ref[...]             # [N, 128]
    h = jnp.maximum(h, 0.0)                 # padded cols stay exactly 0

    # ---- GCNConv(64 -> 32, padded to 128): A_hat @ (H @ W2) + b2, ReLU ----
    hw = jnp.dot(h, w2_ref[...], preferred_element_type=jnp.float32)          # [N, 128]
    h2 = jnp.dot(a, hw.astype(jnp.bfloat16),
                 preferred_element_type=jnp.float32) + b2_ref[...]            # [N, 128]
    h2 = jnp.maximum(h2, 0.0)

    # ---- pooled Linear(32 -> 1), fused as matmul-then-sum, sigmoid ----
    # Project first on the MXU (lane-dense), then one sublane reduction scaled by 1/N.
    proj = jnp.dot(h2, fcw_ref[...], preferred_element_type=jnp.float32)      # [N, 128]
    pooled = jnp.sum(proj, axis=0, keepdims=True) * inv_n + fcb_ref[...]      # [1, 128]
    out_ref[...] = jax.nn.sigmoid(pooled)   # only column 0 is meaningful


# ------------------------------ wrapper ---------------------------------------
def _pad_to(m, rows, cols):
    return jnp.pad(m, ((0, rows - m.shape[0]), (0, cols - m.shape[1])))


def gcn_forward(a_hat, x, w1, b1, w2, b2, fc_w, fc_b):
    """Whole GCN forward in one Pallas call (all operands resident in VMEM)."""
    n = x.shape[0]

    # Lane-pad parameters to 128 columns (zeros elsewhere -> numerics unchanged).
    w1_p = _pad_to(w1, F_IN, LANE)           # [4, 128]
    b1_p = _pad_to(b1, 1, LANE)              # [1, 128]
    w2_p = _pad_to(w2, LANE, LANE)           # [128, 128] (real block [0:64, 0:32])
    b2_p = _pad_to(b2, 1, LANE)              # [1, 128]
    fcw_p = _pad_to(fc_w, LANE, LANE)        # [128, 128] (real block [0:32, 0:1])
    fcb_p = _pad_to(fc_b, 1, LANE)           # [1, 128]

    # bf16 adjacency: halves the only O(N^2) operand; accumulation stays f32.
    a_bf16 = a_hat.astype(jnp.bfloat16)

    # VMEM budget: actual buffers + generous headroom (matters once N scales,
    # especially on v7x where physical VMEM is 64 MiB).
    est_bytes = (2 * n * n                    # A_hat (bf16)
                 + 4 * n * F_IN               # X
                 + 4 * (F_IN * LANE + LANE * LANE * 2 + 4 * LANE)   # params
                 + 4 * n * LANE * 4           # f32 intermediates
                 + 4 * LANE)                  # output row
    vmem_limit = int(min(32 * 1024 * 1024, max(4 * 1024 * 1024, 4 * est_bytes)))

    cost = pl.CostEstimate(
        flops=2 * n * F_IN * LANE            # X @ W1
              + 2 * n * n * LANE             # A @ (XW1)
              + 2 * n * LANE * LANE          # H @ W2
              + 2 * n * n * LANE             # A @ (HW2)
              + 2 * n * LANE * LANE,         # H2 @ fc_w
        transcendentals=LANE,                # sigmoid row
        bytes_accessed=2 * n * n + 4 * n * F_IN
                       + 4 * (F_IN * LANE + 2 * LANE * LANE + 4 * LANE) + 4 * LANE,
    )

    out = pl.pallas_call(
        gcn_kernel,
        out_shape=jax.ShapeDtypeStruct((1, LANE), jnp.float32),
        in_specs=[pl.BlockSpec(memory_space=pltpu.MemorySpace.VMEM)] * 8,
        out_specs=pl.BlockSpec(memory_space=pltpu.MemorySpace.VMEM),
        compiler_params=pltpu.CompilerParams(vmem_limit_bytes=vmem_limit),
        cost_estimate=cost,
    )(a_bf16, x, w1_p, b1_p, w2_p, b2_p, fcw_p, fcb_p)

    return out[0, :1]                        # matches torch output shape [1]


# ------------------------------ JAX glue --------------------------------------
def build_normalized_adjacency(edge_index, num_nodes):
    """Dense A_hat = D^-1/2 (A + I) D^-1/2, PyG GCNConv convention:
       edge_index[0] = source, edge_index[1] = target, messages aggregated into target.
       Uses .add so duplicate edges sum (like PyG message passing) rather than dedup."""
    src, tgt = edge_index[0], edge_index[1]
    adj = jnp.zeros((num_nodes, num_nodes), jnp.float32).at[tgt, src].add(1.0)
    adj = adj + jnp.eye(num_nodes, dtype=jnp.float32)        # add self-loops
    deg = jnp.sum(adj, axis=1)                                # degree incl. self-loop
    d_inv_sqrt = 1.0 / jnp.sqrt(deg)
    return d_inv_sqrt[:, None] * adj * d_inv_sqrt[None, :]


def init_params(key):
    k1, k2, k3 = jax.random.split(key, 3)
    # GCNConv weights (glorot-style scaled normals, deterministic), zero biases.
    w1 = jax.random.normal(k1, (F_IN, HID1), jnp.float32) * (2.0 / (F_IN + HID1)) ** 0.5
    b1 = jnp.zeros((1, HID1), jnp.float32)
    w2 = jax.random.normal(k2, (HID1, HID2), jnp.float32) * (2.0 / (HID1 + HID2)) ** 0.5
    b2 = jnp.zeros((1, HID2), jnp.float32)
    # Linear(32, 1)
    fc_w = jax.random.normal(k3, (HID2, 1), jnp.float32) * (1.0 / HID2) ** 0.5
    fc_b = jnp.zeros((1, 1), jnp.float32)
    return w1, b1, w2, b2, fc_w, fc_b


if __name__ == "__main__":
    key = jax.random.PRNGKey(0)
    k_graph, k_feat, k_params = jax.random.split(key, 3)

    # Small synthetic graph: 16 nodes (multiple of 8 sublanes), 4 input features per node.
    N = 16
    ring_src = jnp.arange(N, dtype=jnp.int32)
    ring_tgt = (ring_src + 1) % N
    rnd = jax.random.randint(k_graph, (2, 8), 0, N, dtype=jnp.int32)
    src = jnp.concatenate([ring_src, rnd[0]])
    tgt = jnp.concatenate([ring_tgt, rnd[1]])
    edge_index = jnp.stack([jnp.concatenate([src, tgt]),
                            jnp.concatenate([tgt, src])], axis=0)   # [2, E] undirected

    x = jax.random.normal(k_feat, (N, F_IN), jnp.float32)           # data.x
    a_hat = build_normalized_adjacency(edge_index, N)               # [N, N]

    params = init_params(k_params)
    out = gcn_forward(a_hat, x, *params)
    jax.block_until_ready(out)

    assert out.shape == (1,)
    assert bool(jnp.all((out >= 0.0) & (out <= 1.0)))
    print("KERNEL_OK")
</pallas_src>

<mosaic_0001>
module attributes {stable_mosaic.version = 11 : i64} {
  func.func @gcn_kernel(%arg0: memref<16x16xbf16, #tpu.memory_space<vmem>>, %arg1: memref<16x4xf32, #tpu.memory_space<vmem>>, %arg2: memref<4x128xf32, #tpu.memory_space<vmem>>, %arg3: memref<1x128xf32, #tpu.memory_space<vmem>>, %arg4: memref<128x128xf32, #tpu.memory_space<vmem>>, %arg5: memref<1x128xf32, #tpu.memory_space<vmem>>, %arg6: memref<128x128xf32, #tpu.memory_space<vmem>>, %arg7: memref<1x128xf32, #tpu.memory_space<vmem>>, %arg8: memref<1x128xf32, #tpu.memory_space<vmem>>) attributes {dimension_semantics = [], scalar_prefetch = 0 : i64, scratch_operands = 0 : i64, tpu.core_type = #tpu.core_type<tc>} {
    %c0 = arith.constant 0 : index
    %c0_0 = arith.constant 0 : index
    %0 = vector.load %arg0[%c0, %c0_0] : memref<16x16xbf16, #tpu.memory_space<vmem>>, vector<16x16xbf16>
    %c0_1 = arith.constant 0 : index
    %c0_2 = arith.constant 0 : index
    %1 = vector.load %arg1[%c0_1, %c0_2] : memref<16x4xf32, #tpu.memory_space<vmem>>, vector<16x4xf32>
    %c0_3 = arith.constant 0 : index
    %c0_4 = arith.constant 0 : index
    %2 = vector.load %arg2[%c0_3, %c0_4] : memref<4x128xf32, #tpu.memory_space<vmem>>, vector<4x128xf32>
    %cst = arith.constant dense<0.000000e+00> : vector<16x128xf32>
    %3 = tpu.matmul %1, %2, %cst {dimension_numbers = #tpu.dot_dimension_numbers<[1], [0], [0], [1], [0, 0, 1, 1], [], []>} : vector<16x4xf32>, vector<4x128xf32>, vector<16x128xf32> -> vector<16x128xf32>
    %4 = arith.truncf %3 : vector<16x128xf32> to vector<16x128xbf16>
    %cst_5 = arith.constant dense<0.000000e+00> : vector<16x128xf32>
    %5 = tpu.matmul %0, %4, %cst_5 {dimension_numbers = #tpu.dot_dimension_numbers<[1], [0], [0], [1], [0, 0, 1, 1], [], []>} : vector<16x16xbf16>, vector<16x128xbf16>, vector<16x128xf32> -> vector<16x128xf32>
    %c0_6 = arith.constant 0 : index
    %c0_7 = arith.constant 0 : index
    %6 = vector.load %arg3[%c0_6, %c0_7] : memref<1x128xf32, #tpu.memory_space<vmem>>, vector<1x128xf32>
    %7 = vector.broadcast %6 : vector<1x128xf32> to vector<16x128xf32>
    %8 = arith.addf %5, %7 : vector<16x128xf32>
    %cst_8 = arith.constant 0.000000e+00 : f32
    %9 = vector.broadcast %cst_8 : f32 to vector<16x128xf32>
    %10 = arith.maximumf %8, %9 : vector<16x128xf32>
    %c0_9 = arith.constant 0 : index
    %c0_10 = arith.constant 0 : index
    %11 = vector.load %arg4[%c0_9, %c0_10] : memref<128x128xf32, #tpu.memory_space<vmem>>, vector<128x128xf32>
    %cst_11 = arith.constant dense<0.000000e+00> : vector<16x128xf32>
    %12 = tpu.matmul %10, %11, %cst_11 {dimension_numbers = #tpu.dot_dimension_numbers<[1], [0], [0], [1], [0, 0, 1, 1], [], []>} : vector<16x128xf32>, vector<128x128xf32>, vector<16x128xf32> -> vector<16x128xf32>
    %13 = arith.truncf %12 : vector<16x128xf32> to vector<16x128xbf16>
    %cst_12 = arith.constant dense<0.000000e+00> : vector<16x128xf32>
    %14 = tpu.matmul %0, %13, %cst_12 {dimension_numbers = #tpu.dot_dimension_numbers<[1], [0], [0], [1], [0, 0, 1, 1], [], []>} : vector<16x16xbf16>, vector<16x128xbf16>, vector<16x128xf32> -> vector<16x128xf32>
    %c0_13 = arith.constant 0 : index
    %c0_14 = arith.constant 0 : index
    %15 = vector.load %arg5[%c0_13, %c0_14] : memref<1x128xf32, #tpu.memory_space<vmem>>, vector<1x128xf32>
    %16 = vector.broadcast %15 : vector<1x128xf32> to vector<16x128xf32>
    %17 = arith.addf %14, %16 : vector<16x128xf32>
    %cst_15 = arith.constant 0.000000e+00 : f32
    %18 = vector.broadcast %cst_15 : f32 to vector<16x128xf32>
    %19 = arith.maximumf %17, %18 : vector<16x128xf32>
    %c0_16 = arith.constant 0 : index
    %c0_17 = arith.constant 0 : index
    %20 = vector.load %arg6[%c0_16, %c0_17] : memref<128x128xf32, #tpu.memory_space<vmem>>, vector<128x128xf32>
    %cst_18 = arith.constant dense<0.000000e+00> : vector<16x128xf32>
    %21 = tpu.matmul %19, %20, %cst_18 {dimension_numbers = #tpu.dot_dimension_numbers<[1], [0], [0], [1], [0, 0, 1, 1], [], []>} : vector<16x128xf32>, vector<128x128xf32>, vector<16x128xf32> -> vector<16x128xf32>
    %cst_19 = arith.constant dense<0.000000e+00> : vector<128xf32>
    %22 = vector.multi_reduction <add>, %21, %cst_19 [0] : vector<16x128xf32> to vector<128xf32>
    %23 = vector.shape_cast %22 : vector<128xf32> to vector<1x128xf32>
    %cst_20 = arith.constant 6.250000e-02 : f32
    %24 = vector.broadcast %cst_20 : f32 to vector<1x128xf32>
    %25 = arith.mulf %23, %24 : vector<1x128xf32>
    %c0_21 = arith.constant 0 : index
    %c0_22 = arith.constant 0 : index
    %26 = vector.load %arg7[%c0_21, %c0_22] : memref<1x128xf32, #tpu.memory_space<vmem>>, vector<1x128xf32>
    %27 = arith.addf %25, %26 : vector<1x128xf32>
    %28 = arith.negf %27 : vector<1x128xf32>
    %29 = math.exp %28 : vector<1x128xf32>
    %cst_23 = arith.constant 1.000000e+00 : f32
    %30 = vector.broadcast %cst_23 : f32 to vector<1x128xf32>
    %31 = arith.addf %30, %29 : vector<1x128xf32>
    %32 = arith.divf %30, %31 : vector<1x128xf32>
    %c0_24 = arith.constant 0 : index
    %c0_25 = arith.constant 0 : index
    %33 = vector.load %arg8[%c0_24, %c0_25] : memref<1x128xf32, #tpu.memory_space<vmem>>, vector<1x128xf32>
    tpu.vector_store %arg8[%c0_24, %c0_25], %32 {strides = array<i32>} : memref<1x128xf32, #tpu.memory_space<vmem>>, vector<1x128xf32>,
    return
  }
}

</mosaic_0001>

<llo_original>
// kernel: tpu_custom_call.1
$region0: #{tpu_custom_call.1}
  #allocation0 [shape = 'u32[]', space=smem, size = 0x4, offset = 0x4, fixed_abs, tag = 'smem constant byte address 0x4 - core index']
  #allocation1 [shape = 'u32[144,128]{1,0:T(1,128)}', space=vmem, size = 0x12000, scoped, tag = 'internal scratch']
  %s0 = inlined_call_operand.vmem [shape: bf16[16,16], index: 0, kind: input, shape index: {}]
  %s1 = inlined_call_operand.vmem [shape: f32[16,4], index: 1, kind: input, shape index: {}]
  %s2 = inlined_call_operand.vmem [shape: f32[4,128], index: 2, kind: input, shape index: {}]
  %s3 = inlined_call_operand.vmem [shape: f32[1,128], index: 3, kind: input, shape index: {}]
  %s4 = inlined_call_operand.hbm [shape: f32[128,128], index: 4, kind: input, shape index: {}]
  %s5 = inlined_call_operand.vmem [shape: f32[1,128], index: 5, kind: input, shape index: {}]
  %s6 = inlined_call_operand.hbm [shape: f32[128,128], index: 6, kind: input, shape index: {}]
  %s7 = inlined_call_operand.vmem [shape: f32[1,128], index: 7, kind: input, shape index: {}]
  %s8 = inlined_call_operand.hbm [shape: f32[1,128], index: 8, kind: output, shape index: {}]
  %s9 = sld [smem:[#allocation0]]
  $region50: #{tpu_custom_call.1} parent=0
    _
  %s11 = ssub.s32 1, %s9
  %s12 = scalar_select 0, %s11, %s9
  $region1: #{tpu_custom_call.1} parent=0
    #allocation2 [shape = 'u8[65536]{0}', space=vmem, size = 0x10000, scoped, tag = 'input window, operand 4, single buffered']
    #allocation3 [shape = 's32[1]{0}', space=sflag, size = 0x4, scoped, tag = 'scoped memory for tpu_custom_call.1']
    #allocation4 [shape = 's32[1]{0}', space=sflag, size = 0x4, scoped, tag = 'scoped memory for tpu_custom_call.1']
    #allocation5 [shape = 'u8[65536]{0}', space=vmem, size = 0x10000, scoped, tag = 'input window, operand 6, single buffered']
    #allocation6 [shape = 's32[1]{0}', space=sflag, size = 0x4, scoped, tag = 'scoped memory for tpu_custom_call.1']
    #allocation7 [shape = 'u8[512]{0}', space=vmem, size = 0x400, scoped, tag = 'output window, operand 0, single buffered']
    %13 = vsyncpa [#allocation3], 0
    %14 = vsyncpa [#allocation6], 0
    %15 = vsyncpa [#allocation4], 0
    // Predicated region
    $region2: #{tpu_custom_call.1} parent=1 // pred_check
      _
    $region3: #{tpu_custom_call.1} parent=1 // pred_check_branch
      %17 = sbr.rel (0) target = $region5
    $region4: #{tpu_custom_call.1} parent=1 // pred_region
      _
    $region5: #{tpu_custom_call.1} parent=1 // pred_fallthru
      _
    // Predicated region
    $region6: #{tpu_custom_call.1} parent=1 // pred_check
      _
    $region7: #{tpu_custom_call.1} parent=1 // pred_check_branch
      %19 = sbr.rel (0) target = $region9
    $region8: #{tpu_custom_call.1} parent=1 // pred_region
      _
    $region9: #{tpu_custom_call.1} parent=1 // pred_fallthru
      _
    // Predicated region
    $region10: #{tpu_custom_call.1} parent=1 // pred_check
      _
    $region11: #{tpu_custom_call.1} parent=1 // pred_check_branch
      %21 = sbr.rel (0) target = $region13
    $region12: #{tpu_custom_call.1} parent=1 // pred_region
      _
    $region13: #{tpu_custom_call.1} parent=1 // pred_fallthru
      _
    // Predicated region
    $region14: #{tpu_custom_call.1} parent=1 // pred_check
      _
    $region15: #{tpu_custom_call.1} parent=1 // pred_check_branch
      %23 = sbr.rel (0) target = $region17
    $region16: #{tpu_custom_call.1} parent=1 // pred_region
      _
    $region17: #{tpu_custom_call.1} parent=1 // pred_fallthru
      _
    // Predicated region
    $region18: #{tpu_custom_call.1} parent=1 // pred_check
      _
    $region19: #{tpu_custom_call.1} parent=1 // pred_check_branch
      %25 = sbr.rel (0) target = $region21
    $region20: #{tpu_custom_call.1} parent=1 // pred_region
      %s27 = ssub.s32 2048, 2048
      %28 = vsyncadd [#allocation3], %s27
      %s29 = sshll.u32 [#allocation2], 4
      %s30 = int_to_ptr.vmem [resolvable:$true] %s29
      %35 = dma.hbm_to_vmem [thread:$0]  %s4, 2048, %s30, [#allocation3], 128, 128, 8
    $region21: #{tpu_custom_call.1} parent=1 // pred_fallthru
      _
    // Predicated region
    $region22: #{tpu_custom_call.1} parent=1 // pred_check
      _
    $region23: #{tpu_custom_call.1} parent=1 // pred_check_branch
      %37 = sbr.rel (0) target = $region25
    $region24: #{tpu_custom_call.1} parent=1 // pred_region
      _
    $region25: #{tpu_custom_call.1} parent=1 // pred_fallthru
      _
    // Predicated region
    $region26: #{tpu_custom_call.1} parent=1 // pred_check
      _
    $region27: #{tpu_custom_call.1} parent=1 // pred_check_branch
      %39 = sbr.rel (0) target = $region29
    $region28: #{tpu_custom_call.1} parent=1 // pred_region
      %s41 = ssub.s32 2048, 2048
      %42 = vsyncadd [#allocation6], %s41
      %s43 = sshll.u32 [#allocation5], 4
      %s44 = int_to_ptr.vmem [resolvable:$true] %s43
      %49 = dma.hbm_to_vmem [thread:$0]  %s6, 2048, %s44, [#allocation6], 128, 128, 8
    $region29: #{tpu_custom_call.1} parent=1 // pred_fallthru
      _
    // Predicated region
    $region30: #{tpu_custom_call.1} parent=1 // pred_check
      _
    $region31: #{tpu_custom_call.1} parent=1 // pred_check_branch
      %51 = sbr.rel (0) target = $region33
    $region32: #{tpu_custom_call.1} parent=1 // pred_region
      _
    $region33: #{tpu_custom_call.1} parent=1 // pred_fallthru
      _
    // Predicated region
    $region34: #{tpu_custom_call.1} parent=1 // pred_check
      _
    $region35: #{tpu_custom_call.1} parent=1 // pred_check_branch
      %53 = sbr.rel (0) target = $region37
    $region36: #{tpu_custom_call.1} parent=1 // pred_region
      %54 = dma.done [#allocation3], 2048
    $region37: #{tpu_custom_call.1} parent=1 // pred_fallthru
      _
    // Predicated region
    $region38: #{tpu_custom_call.1} parent=1 // pred_check
      _
    $region39: #{tpu_custom_call.1} parent=1 // pred_check_branch
      %56 = sbr.rel (0) target = $region41
    $region40: #{tpu_custom_call.1} parent=1 // pred_region
      %57 = dma.done [#allocation6], 2048
    $region41: #{tpu_custom_call.1} parent=1 // pred_fallthru
      _
    %v59 = vld [vmem:[%s0] sm:$0xf]
    %v60 = vld [vmem:[%s0 + $0x4] sm:$0xf]
    %v61 = vld [vmem:[%s1] sm:$0xff]
    %v62 = vld [vmem:[%s1 + $0x8] sm:$0xff]
    %v63 = vld [vmem:[%s2] sm:$0xf]
    %vm64 = vcmask 31744
    %v66 = vsel %vm64, %v61, 0
    %v69 = vsel %vm64, %v62, 0
    %vm71 = vcmask 1043456
    %v73 = vsel %vm71, %v63, 0
    %75 = vmatprep.subr.mxu0 0.0
    %76 = vmatpush1.msra.mxu0 0.0
    %77 = vmatprep.subr.mxu0 0.0
    %78 = vmatpush1.msra.mxu0 0.0
    %79 = vmatprep.subr.mxu0 0.0
    %80 = vmatpush1.msra.mxu0 0.0
    %81 = vmatprep.subr.mxu0 0.0
    %82 = vmatpush1.msra.mxu0 0.0
    %83 = vmatprep.subr.mxu0 0.0
    %84 = vmatpush1.msra.mxu0 0.0
    %85 = vmatprep.subr.mxu0 0.0
    %86 = vmatpush1.msra.mxu0 0.0
    %87 = vmatprep.subr.mxu0 0.0
    %88 = vmatpush1.msra.mxu0 0.0
    %89 = vmatprep.subr.mxu0 0.0
    %90 = vmatpush1.msra.mxu0 0.0
    %91 = vmatprep.subr.mxu0 0.0
    %92 = vmatpush1.msra.mxu0 0.0
    %93 = vmatprep.subr.mxu0 0.0
    %94 = vmatpush1.msra.mxu0 0.0
    %95 = vmatprep.subr.mxu0 0.0
    %96 = vmatpush1.msra.mxu0 0.0
    %97 = vmatprep.subr.mxu0 0.0
    %98 = vmatpush1.msra.mxu0 0.0
    %99 = vmatprep.subr.mxu0 0.0
    %100 = vmatpush1.msra.mxu0 0.0
    %101 = vmatprep.subr.mxu0 0.0
    %102 = vmatpush1.msra.mxu0 0.0
    %103 = vmatprep.subr.mxu0 0.0
    %104 = vmatpush1.msra.mxu0 0.0
    %105 = vmatprep.subr.mxu0 0.0
    %106 = vmatpush1.msra.mxu0 %v73
    %107 = vmatprep.subr.mxu0 0.0
    %108 = vmatpush2.msra.mxu0 0.0
    %109 = vmatprep.subr.mxu0 0.0
    %110 = vmatpush2.msra.mxu0 0.0
    %111 = vmatprep.subr.mxu0 0.0
    %112 = vmatpush2.msra.mxu0 0.0
    %113 = vmatprep.subr.mxu0 0.0
    %114 = vmatpush2.msra.mxu0 0.0
    %115 = vmatprep.subr.mxu0 0.0
    %116 = vmatpush2.msra.mxu0 0.0
    %117 = vmatprep.subr.mxu0 0.0
    %118 = vmatpush2.msra.mxu0 0.0
    %119 = vmatprep.subr.mxu0 0.0
    %120 = vmatpush2.msra.mxu0 0.0
    %121 = vmatprep.subr.mxu0 0.0
    %122 = vmatpush2.msra.mxu0 0.0
    %123 = vmatprep.subr.mxu0 0.0
    %124 = vmatpush2.msra.mxu0 0.0
    %125 = vmatprep.subr.mxu0 0.0
    %126 = vmatpush2.msra.mxu0 0.0
    %127 = vmatprep.subr.mxu0 0.0
    %128 = vmatpush2.msra.mxu0 0.0
    %129 = vmatprep.subr.mxu0 0.0
    %130 = vmatpush2.msra.mxu0 0.0
    %131 = vmatprep.subr.mxu0 0.0
    %132 = vmatpush2.msra.mxu0 0.0
    %133 = vmatprep.subr.mxu0 0.0
    %134 = vmatpush2.msra.mxu0 0.0
    %135 = vmatprep.subr.mxu0 0.0
    %136 = vmatpush2.msra.mxu0 0.0
    %137 = vmatprep.subr.mxu0 0.0
    %138 = vmatpush2.msra.mxu0 0.0
    %139 = vmatprep.mubr.f32.mxu0 0.0
    %140 = vmatmul.mubr.f32.gmra.mxu0 %v66
    %v141 = vpop.f32.mrf.mxu0
    %v142 = vadd.f32 0.0, %v141
    %v143 = vpop.f32.mrf.mxu0
    %144 = vmatprep.mubr.f32.mxu0 0.0
    %145 = vmatmul.mubr.f32.gmra.mxu0 %v69
    %v146 = vpop.f32.mrf.mxu0
    %v147 = vadd.f32 0.0, %v146
    %v148 = vpop.f32.mrf.mxu0
    %149 = vdwg.mxu0
    %v150 = vpack.c.bf16 %v147, %v142
    %v151 = vld [vmem:[%s3] sm:$0x1]
    %v153 = vlaneseq
    %v154 = vshrl.u32 %v153, 7
    %v155 = vsub.s32 0, %v154
    %v156 = vrot.slane %v151, %v155
    %v160 = vunpack.c.l.b16 %v59
    %v161 = vunpack.c.l.b16 %v60
    %v162 = vpack.c.b16 %v161, %v160
    %vm163 = vcmask 130048
    %v165 = vsel %vm163, %v162, 0
    %167 = vmatprep.subr.bf16.mxu0 0
    %168 = vmatpush1.bf16.msra.mxu0 0
    %169 = vmatprep.subr.bf16.mxu0 0
    %170 = vmatpush1.bf16.msra.mxu0 0
    %171 = vmatprep.subr.bf16.mxu0 0
    %172 = vmatpush1.bf16.msra.mxu0 0
    %173 = vmatprep.subr.bf16.mxu0 0
    %174 = vmatpush1.bf16.msra.mxu0 0
    %175 = vmatprep.subr.bf16.mxu0 0
    %176 = vmatpush1.bf16.msra.mxu0 0
    %177 = vmatprep.subr.bf16.mxu0 0
    %178 = vmatpush1.bf16.msra.mxu0 0
    %179 = vmatprep.subr.bf16.mxu0 0
    %180 = vmatpush1.bf16.msra.mxu0 0
    %181 = vmatprep.subr.bf16.mxu0 0
    %182 = vmatpush1.bf16.msra.mxu0 %v150
    %183 = vmatprep.subr.bf16.mxu0 0
    %184 = vmatpush2.bf16.msra.mxu0 0
    %185 = vmatprep.subr.bf16.mxu0 0
    %186 = vmatpush2.bf16.msra.mxu0 0
    %187 = vmatprep.subr.bf16.mxu0 0
    %188 = vmatpush2.bf16.msra.mxu0 0
    %189 = vmatprep.subr.bf16.mxu0 0
    %190 = vmatpush2.bf16.msra.mxu0 0
    %191 = vmatprep.subr.bf16.mxu0 0
    %192 = vmatpush2.bf16.msra.mxu0 0
    %193 = vmatprep.subr.bf16.mxu0 0
    %194 = vmatpush2.bf16.msra.mxu0 0
    %195 = vmatprep.subr.bf16.mxu0 0
    %196 = vmatpush2.bf16.msra.mxu0 0
    %197 = vmatprep.subr.bf16.mxu0 0
    %198 = vmatpush2.bf16.msra.mxu0 0
    %199 = vmatprep.mubr.bf16.mxu0 0
    %200 = vmatmul.mubr.bf16.gmra.mxu0 %v165
    %v201 = vpop.f32.mrf.mxu0
    %v202 = vadd.f32 %v156, %v201
    %v203 = vpop.f32.mrf.mxu0
    %v204 = vpop.f32.mrf.mxu0
    %v205 = vadd.f32 %v156, %v204
    %v206 = vpop.f32.mrf.mxu0
    %207 = vdwg.mxu0
    %v208 = vmax.f32 %v202, 0.0
    %v209 = vmax.f32 %v205, 0.0
    %v210 = vld [vmem:[#allocation2] sm:$0xff]
    %v211 = vld [vmem:[#allocation2 + $0x8] sm:$0xff]
    %v212 = vld [vmem:[#allocation2 + $0x10] sm:$0xff]
    %v213 = vld [vmem:[#allocation2 + $0x18] sm:$0xff]
    %v214 = vld [vmem:[#allocation2 + $0x20] sm:$0xff]
    %v215 = vld [vmem:[#allocation2 + $0x28] sm:$0xff]
    %v216 = vld [vmem:[#allocation2 + $0x30] sm:$0xff]
    %v217 = vld [vmem:[#allocation2 + $0x38] sm:$0xff]
    %v218 = vld [vmem:[#allocation2 + $0x40] sm:$0xff]
    %v219 = vld [vmem:[#allocation2 + $0x48] sm:$0xff]
    %v220 = vld [vmem:[#allocation2 + $0x50] sm:$0xff]
    %v221 = vld [vmem:[#allocation2 + $0x58] sm:$0xff]
    %v222 = vld [vmem:[#allocation2 + $0x60] sm:$0xff]
    %v223 = vld [vmem:[#allocation2 + $0x68] sm:$0xff]
    %v224 = vld [vmem:[#allocation2 + $0x70] sm:$0xff]
    %v225 = vld [vmem:[#allocation2 + $0x78] sm:$0xff]
    %226 = vmatprep.subr.mxu0 0.0
    %227 = vmatpush1.msra.mxu0 %v225
    %228 = vmatprep.subr.mxu0 0.0
    %229 = vmatpush1.msra.mxu0 %v224
    %230 = vmatprep.subr.mxu0 0.0
    %231 = vmatpush1.msra.mxu0 %v223
    %232 = vmatprep.subr.mxu0 0.0
    %233 = vmatpush1.msra.mxu0 %v222
    %234 = vmatprep.subr.mxu0 0.0
    %235 = vmatpush1.msra.mxu0 %v221
    %236 = vmatprep.subr.mxu0 0.0
    %237 = vmatpush1.msra.mxu0 %v220
    %238 = vmatprep.subr.mxu0 0.0
    %239 = vmatpush1.msra.mxu0 %v219
    %240 = vmatprep.subr.mxu0 0.0
    %241 = vmatpush1.msra.mxu0 %v218
    %242 = vmatprep.subr.mxu0 0.0
    %243 = vmatpush1.msra.mxu0 %v217
    %244 = vmatprep.subr.mxu0 0.0
    %245 = vmatpush1.msra.mxu0 %v216
    %246 = vmatprep.subr.mxu0 0.0
    %247 = vmatpush1.msra.mxu0 %v215
    %248 = vmatprep.subr.mxu0 0.0
    %249 = vmatpush1.msra.mxu0 %v214
    %250 = vmatprep.subr.mxu0 0.0
    %251 = vmatpush1.msra.mxu0 %v213
    %252 = vmatprep.subr.mxu0 0.0
    %253 = vmatpush1.msra.mxu0 %v212
    %254 = vmatprep.subr.mxu0 0.0
    %255 = vmatpush1.msra.mxu0 %v211
    %256 = vmatprep.subr.mxu0 0.0
    %257 = vmatpush1.msra.mxu0 %v210
    %258 = vmatprep.subr.mxu0 0.0
    %259 = vmatpush2.msra.mxu0 0.0
    %260 = vmatprep.subr.mxu0 0.0
    %261 = vmatpush2.msra.mxu0 0.0
    %262 = vmatprep.subr.mxu0 0.0
    %263 = vmatpush2.msra.mxu0 0.0
    %264 = vmatprep.subr.mxu0 0.0
    %265 = vmatpush2.msra.mxu0 0.0
    %266 = vmatprep.subr.mxu0 0.0
    %267 = vmatpush2.msra.mxu0 0.0
    %268 = vmatprep.subr.mxu0 0.0
    %269 = vmatpush2.msra.mxu0 0.0
    %270 = vmatprep.subr.mxu0 0.0
    %271 = vmatpush2.msra.mxu0 0.0
    %272 = vmatprep.subr.mxu0 0.0
    %273 = vmatpush2.msra.mxu0 0.0
    %274 = vmatprep.subr.mxu0 0.0
    %275 = vmatpush2.msra.mxu0 0.0
    %276 = vmatprep.subr.mxu0 0.0
    %277 = vmatpush2.msra.mxu0 0.0
    %278 = vmatprep.subr.mxu0 0.0
    %279 = vmatpush2.msra.mxu0 0.0
    %280 = vmatprep.subr.mxu0 0.0
    %281 = vmatpush2.msra.mxu0 0.0
    %282 = vmatprep.subr.mxu0 0.0
    %283 = vmatpush2.msra.mxu0 0.0
    %284 = vmatprep.subr.mxu0 0.0
    %285 = vmatpush2.msra.mxu0 0.0
    %286 = vmatprep.subr.mxu0 0.0
    %287 = vmatpush2.msra.mxu0 0.0
    %288 = vmatprep.subr.mxu0 0.0
    %289 = vmatpush2.msra.mxu0 0.0
    %290 = vmatprep.mubr.f32.mxu0 0.0
    %291 = vmatmul.mubr.f32.gmra.mxu0 %v208
    %v292 = vpop.f32.mrf.mxu0
    %v293 = vadd.f32 0.0, %v292
    %v294 = vpop.f32.mrf.mxu0
    %295 = vmatprep.mubr.f32.mxu0 0.0
    %296 = vmatmul.mubr.f32.gmra.mxu0 %v209
    %v297 = vpop.f32.mrf.mxu0
    %v298 = vadd.f32 0.0, %v297
    %v299 = vpop.f32.mrf.mxu0
    %300 = vdwg.mxu0
    %v301 = vpack.c.bf16 %v298, %v293
    %v302 = vld [vmem:[%s5] sm:$0x1]
    %v304 = vlaneseq
    %v305 = vshrl.u32 %v304, 7
    %v306 = vsub.s32 0, %v305
    %v307 = vrot.slane %v302, %v306
    %309 = vmatprep.subr.bf16.mxu0 0
    %310 = vmatpush1.bf16.msra.mxu0 0
    %311 = vmatprep.subr.bf16.mxu0 0
    %312 = vmatpush1.bf16.msra.mxu0 0
    %313 = vmatprep.subr.bf16.mxu0 0
    %314 = vmatpush1.bf16.msra.mxu0 0
    %315 = vmatprep.subr.bf16.mxu0 0
    %316 = vmatpush1.bf16.msra.mxu0 0
    %317 = vmatprep.subr.bf16.mxu0 0
    %318 = vmatpush1.bf16.msra.mxu0 0
    %319 = vmatprep.subr.bf16.mxu0 0
    %320 = vmatpush1.bf16.msra.mxu0 0
    %321 = vmatprep.subr.bf16.mxu0 0
    %322 = vmatpush1.bf16.msra.mxu0 0
    %323 = vmatprep.subr.bf16.mxu0 0
    %324 = vmatpush1.bf16.msra.mxu0 %v301
    %325 = vmatprep.subr.bf16.mxu0 0
    %326 = vmatpush2.bf16.msra.mxu0 0
    %327 = vmatprep.subr.bf16.mxu0 0
    %328 = vmatpush2.bf16.msra.mxu0 0
    %329 = vmatprep.subr.bf16.mxu0 0
    %330 = vmatpush2.bf16.msra.mxu0 0
    %331 = vmatprep.subr.bf16.mxu0 0
    %332 = vmatpush2.bf16.msra.mxu0 0
    %333 = vmatprep.subr.bf16.mxu0 0
    %334 = vmatpush2.bf16.msra.mxu0 0
    %335 = vmatprep.subr.bf16.mxu0 0
    %336 = vmatpush2.bf16.msra.mxu0 0
    %337 = vmatprep.subr.bf16.mxu0 0
    %338 = vmatpush2.bf16.msra.mxu0 0
    %339 = vmatprep.subr.bf16.mxu0 0
    %340 = vmatpush2.bf16.msra.mxu0 0
    %341 = vmatprep.mubr.bf16.mxu0 0
    %342 = vmatmul.mubr.bf16.gmra.mxu0 %v165
    %v343 = vpop.f32.mrf.mxu0
    %v344 = vadd.f32 %v307, %v343
    %v345 = vpop.f32.mrf.mxu0
    %v346 = vpop.f32.mrf.mxu0
    %v347 = vadd.f32 %v307, %v346
    %v348 = vpop.f32.mrf.mxu0
    %349 = vdwg.mxu0
    %v350 = vmax.f32 %v344, 0.0
    %v351 = vmax.f32 %v347, 0.0
    %v352 = vld [vmem:[#allocation5] sm:$0xff]
    %v353 = vld [vmem:[#allocation5 + $0x8] sm:$0xff]
    %v354 = vld [vmem:[#allocation5 + $0x10] sm:$0xff]
    %v355 = vld [vmem:[#allocation5 + $0x18] sm:$0xff]
    %v356 = vld [vmem:[#allocation5 + $0x20] sm:$0xff]
    %v357 = vld [vmem:[#allocation5 + $0x28] sm:$0xff]
    %v358 = vld [vmem:[#allocation5 + $0x30] sm:$0xff]
    %v359 = vld [vmem:[#allocation5 + $0x38] sm:$0xff]
    %v360 = vld [vmem:[#allocation5 + $0x40] sm:$0xff]
    %v361 = vld [vmem:[#allocation5 + $0x48] sm:$0xff]
    %v362 = vld [vmem:[#allocation5 + $0x50] sm:$0xff]
    %v363 = vld [vmem:[#allocation5 + $0x58] sm:$0xff]
    %v364 = vld [vmem:[#allocation5 + $0x60] sm:$0xff]
    %v365 = vld [vmem:[#allocation5 + $0x68] sm:$0xff]
    %v366 = vld [vmem:[#allocation5 + $0x70] sm:$0xff]
    %v367 = vld [vmem:[#allocation5 + $0x78] sm:$0xff]
    %368 = vmatprep.subr.mxu0 0.0
    %369 = vmatpush1.msra.mxu0 %v367
    %370 = vmatprep.subr.mxu0 0.0
    %371 = vmatpush1.msra.mxu0 %v366
    %372 = vmatprep.subr.mxu0 0.0
    %373 = vmatpush1.msra.mxu0 %v365
    %374 = vmatprep.subr.mxu0 0.0
    %375 = vmatpush1.msra.mxu0 %v364
    %376 = vmatprep.subr.mxu0 0.0
    %377 = vmatpush1.msra.mxu0 %v363
    %378 = vmatprep.subr.mxu0 0.0
    %379 = vmatpush1.msra.mxu0 %v362
    %380 = vmatprep.subr.mxu0 0.0
    %381 = vmatpush1.msra.mxu0 %v361
    %382 = vmatprep.subr.mxu0 0.0
    %383 = vmatpush1.msra.mxu0 %v360
    %384 = vmatprep.subr.mxu0 0.0
    %385 = vmatpush1.msra.mxu0 %v359
    %386 = vmatprep.subr.mxu0 0.0
    %387 = vmatpush1.msra.mxu0 %v358
    %388 = vmatprep.subr.mxu0 0.0
    %389 = vmatpush1.msra.mxu0 %v357
    %390 = vmatprep.subr.mxu0 0.0
    %391 = vmatpush1.msra.mxu0 %v356
    %392 = vmatprep.subr.mxu0 0.0
    %393 = vmatpush1.msra.mxu0 %v355
    %394 = vmatprep.subr.mxu0 0.0
    %395 = vmatpush1.msra.mxu0 %v354
    %396 = vmatprep.subr.mxu0 0.0
    %397 = vmatpush1.msra.mxu0 %v353
    %398 = vmatprep.subr.mxu0 0.0
    %399 = vmatpush1.msra.mxu0 %v352
    %400 = vmatprep.subr.mxu0 0.0
    %401 = vmatpush2.msra.mxu0 0.0
    %402 = vmatprep.subr.mxu0 0.0
    %403 = vmatpush2.msra.mxu0 0.0
    %404 = vmatprep.subr.mxu0 0.0
    %405 = vmatpush2.msra.mxu0 0.0
    %406 = vmatprep.subr.mxu0 0.0
    %407 = vmatpush2.msra.mxu0 0.0
    %408 = vmatprep.subr.mxu0 0.0
    %409 = vmatpush2.msra.mxu0 0.0
    %410 = vmatprep.subr.mxu0 0.0
    %411 = vmatpush2.msra.mxu0 0.0
    %412 = vmatprep.subr.mxu0 0.0
    %413 = vmatpush2.msra.mxu0 0.0
    %414 = vmatprep.subr.mxu0 0.0
    %415 = vmatpush2.msra.mxu0 0.0
    %416 = vmatprep.subr.mxu0 0.0
    %417 = vmatpush2.msra.mxu0 0.0
    %418 = vmatprep.subr.mxu0 0.0
    %419 = vmatpush2.msra.mxu0 0.0
    %420 = vmatprep.subr.mxu0 0.0
    %421 = vmatpush2.msra.mxu0 0.0
    %422 = vmatprep.subr.mxu0 0.0
    %423 = vmatpush2.msra.mxu0 0.0
    %424 = vmatprep.subr.mxu0 0.0
    %425 = vmatpush2.msra.mxu0 0.0
    %426 = vmatprep.subr.mxu0 0.0
    %427 = vmatpush2.msra.mxu0 0.0
    %428 = vmatprep.subr.mxu0 0.0
    %429 = vmatpush2.msra.mxu0 0.0
    %430 = vmatprep.subr.mxu0 0.0
    %431 = vmatpush2.msra.mxu0 0.0
    %432 = vmatprep.mubr.f32.mxu0 0.0
    %433 = vmatmul.mubr.f32.gmra.mxu0 %v350
    %v434 = vpop.f32.mrf.mxu0
    %v435 = vadd.f32 0.0, %v434
    %v436 = vpop.f32.mrf.mxu0
    %437 = vmatprep.mubr.f32.mxu0 0.0
    %438 = vmatmul.mubr.f32.gmra.mxu0 %v351
    %v439 = vpop.f32.mrf.mxu0
    %v440 = vadd.f32 0.0, %v439
    %v441 = vpop.f32.mrf.mxu0
    %442 = vdwg.mxu0
    %v443 = vadd.f32 %v435, %v440
    %v444 = vrot.slane %v443, 4
    %v445 = vadd.f32 %v443, %v444
    %v446 = vrot.slane %v445, 2
    %v447 = vadd.f32 %v445, %v446
    %v448 = vrot.slane %v447, 1
    %v449 = vadd.f32 %v447, %v448
    %v450 = vmul.f32 %v449, 0.0625
    %v451 = vld [vmem:[%s7] sm:$0x1]
    %v452 = vadd.f32 %v450, %v451
    %v453 = vxor.u32 %v452, 2147483648
    %v454 = vmul.f32 %v453, 1.442695
    %v455 = vpow.pop %v454
    %v456 = vadd.f32 %v455, 1.0
    %v457 = vrcp.pop %v456
    %v458 = vmul.f32 1.0, %v457
    %459 = vst [vmem:[#allocation7] sm:$0x1] %v458
    // Predicated region
    $region42: #{tpu_custom_call.1} parent=1 // pred_check
      _
    $region43: #{tpu_custom_call.1} parent=1 // pred_check_branch
      %461 = sbr.rel (0) target = $region45
    $region44: #{tpu_custom_call.1} parent=1 // pred_region
      %s463 = ssub.s32 16, 16
      %464 = vsyncadd [#allocation4], %s463
      %s466 = sshll.u32 [#allocation7], 4
      %s467 = int_to_ptr.vmem [resolvable:$true] %s466
      %469 = dma.vmem_to_hbm [thread:$0]  %s467, 16, %s8, [#allocation4]
    $region45: #{tpu_custom_call.1} parent=1 // pred_fallthru
      _
    // Predicated region
    $region46: #{tpu_custom_call.1} parent=1 // pred_check
      _
    $region47: #{tpu_custom_call.1} parent=1 // pred_check_branch
      %471 = sbr.rel (0) target = $region49
    $region48: #{tpu_custom_call.1} parent=1 // pred_region
      %472 = dma.done [#allocation4], 16
    $region49: #{tpu_custom_call.1} parent=1 // pred_fallthru
      _
    %473 = vsyncpa [#allocation3], 1
    %474 = vsyncpa [#allocation6], 1
    %475 = vsyncpa [#allocation4], 1

</llo_original>
